<compile_context>
chip_gen: v6e
topology: v6e:2x2x1
jax: 0.10.0
libtpu: 0.0.40
codegen_flags: <defaults>
</compile_context>

<pallas_src>
import functools

import jax
import jax.numpy as jnp
from jax.experimental import pallas as pl
from jax.experimental.pallas import tpu as pltpu


def mlp_kernel(x_ref, w1_ref, b1_ref, w2_ref, b2_ref, o_ref):
    """One batch tile of fc1 -> tanh -> fc2 (all operands VMEM-resident)."""
    x = x_ref[...]                                              # (TILE_B, IN)
    h = jnp.tanh(
        jnp.dot(x, w1_ref[...], preferred_element_type=jnp.float32)
        + b1_ref[...]                                           # (1, H) broadcast
    )                                                           # (TILE_B, H)
    y = (jnp.dot(h, w2_ref[...], preferred_element_type=jnp.float32)
         + b2_ref[...])                                         # (TILE_B, OUT)
    o_ref[...] = y.astype(o_ref.dtype)


def choose_tile_b(batch, max_tile=1024, pref_tiles=2):
    """Cover the batch with the fewest, largest sublane-aligned tiles.

    Prefers >= 2 tiles when the batch is big enough so v7x's two TensorCores
    both get work; on single-TC v5e/v6e the grid is just a short serial loop.
    """
    if batch <= 8:
        return 8
    ntiles = pref_tiles if batch > 8 * pref_tiles else 1
    tile_b = -(-batch // ntiles)            # ceil
    tile_b = ((tile_b + 7) // 8) * 8        # f32 sublane alignment
    return min(tile_b, max_tile)


@functools.partial(jax.jit, static_argnames=("tile_b",))
def rl_net_test_forward(x, w1, b1, w2, b2, *, tile_b=1024):
    """Forward pass of RL_net_test.

    x : (B, in_feature) f32
    w1: (in_feature, hidden) f32   (transposed vs. PyTorch storage)
    b1: (hidden,) f32
    w2: (hidden, out_feature) f32
    b2: (out_feature,) f32
    """
    B, in_f = x.shape
    hid = w1.shape[1]
    out_f = w2.shape[1]

    b1r = b1.reshape(1, hid)
    b2r = b2.reshape(1, out_f)

    ntiles = pl.cdiv(B, tile_b)
    b_pad = ntiles * tile_b
    if b_pad != B:
        # Fallback only when the batch doesn't divide the tile; choose_tile_b
        # avoids this in the common case so no extra HBM copy of x is made.
        x = jnp.pad(x, ((0, b_pad - B), (0, 0)))

    itemsize = jnp.dtype(x.dtype).itemsize
    flops = 2 * b_pad * (in_f * hid + hid * out_f)
    bytes_accessed = itemsize * (
        b_pad * in_f + w1.size + hid + hid * out_f + out_f + b_pad * out_f
    )

    out = pl.pallas_call(
        mlp_kernel,
        out_shape=jax.ShapeDtypeStruct((b_pad, out_f), x.dtype),
        grid_spec=pltpu.PrefetchScalarGridSpec(
            num_scalar_prefetch=0,
            grid=(ntiles,),
            in_specs=[
                pl.BlockSpec((tile_b, in_f), lambda i: (i, 0)),
                # Constant index_maps: params DMA'd once, VMEM-resident across
                # every batch tile of the grid.  (pipeline_mode=pl.Buffered(1)
                # would also drop their double-buffer; omitted, footprint ~3 KB.)
                pl.BlockSpec((in_f, hid), lambda i: (0, 0)),
                pl.BlockSpec((1, hid), lambda i: (0, 0)),
                pl.BlockSpec((hid, out_f), lambda i: (0, 0)),
                pl.BlockSpec((1, out_f), lambda i: (0, 0)),
            ],
            # Output last dim equals the full array dim -> legal block; writes
            # only the useful out_feature lanes instead of a 128-lane pad.
            out_specs=pl.BlockSpec((tile_b, out_f), lambda i: (i, 0)),
        ),
        compiler_params=pltpu.CompilerParams(
            dimension_semantics=("parallel",),  # shard batch tiles across TCs (v7x)
        ),
        cost_estimate=pl.CostEstimate(
            flops=flops,
            transcendentals=b_pad * hid,
            bytes_accessed=bytes_accessed,
        ),
    )(x, w1, b1r, w2, b2r)

    return out[:B, :]


def init_params(key, in_feature, out_feature, hidden_feature=16):
    """Deterministic init matching nn.Linear's default U(-1/sqrt(fan_in), +).
    Weights are stored transposed vs. PyTorch: W1:(in, hidden), W2:(hidden, out)."""
    k1, k2, k3, k4 = jax.random.split(key, 4)
    bound1 = 1.0 / jnp.sqrt(in_feature)
    bound2 = 1.0 / jnp.sqrt(hidden_feature)
    w1 = jax.random.uniform(k1, (in_feature, hidden_feature), jnp.float32,
                            -bound1, bound1)
    b1 = jax.random.uniform(k2, (hidden_feature,), jnp.float32, -bound1, bound1)
    w2 = jax.random.uniform(k3, (hidden_feature, out_feature), jnp.float32,
                            -bound2, bound2)
    b2 = jax.random.uniform(k4, (out_feature,), jnp.float32, -bound2, bound2)
    return w1, b1, w2, b2


if __name__ == "__main__":
    key = jax.random.PRNGKey(0)
    kx, kp = jax.random.split(key)

    # Amortize the Pallas call over many policy evaluations (vectorized envs /
    # timesteps); the per-net shapes match the module defaults.
    batch = 256
    in_feature = 32       # embedding dim of obs
    hidden_feature = 16   # module default
    out_feature = 4       # number of actions

    x = jax.random.normal(kx, (batch, in_feature), jnp.float32)
    w1, b1, w2, b2 = init_params(kp, in_feature, out_feature, hidden_feature)

    tile_b = choose_tile_b(batch)   # -> 128 here: 2 parallel tiles, no padding
    out = rl_net_test_forward(x, w1, b1, w2, b2, tile_b=tile_b)
    out = jax.block_until_ready(out)

    # pure-JAX reference check
    ref = jnp.tanh(x @ w1 + b1) @ w2 + b2
    assert out.shape == (batch, out_feature)
    assert jnp.allclose(out, ref, atol=1e-5, rtol=1e-5)

    print("KERNEL_OK")
</pallas_src>

<mosaic_0001>
module attributes {stable_mosaic.version = 11 : i64} {
  func.func @mlp_kernel(%arg0: i32, %arg1: memref<128x32xf32, #tpu.memory_space<vmem>>, %arg2: memref<32x16xf32, #tpu.memory_space<vmem>>, %arg3: memref<1x16xf32, #tpu.memory_space<vmem>>, %arg4: memref<16x4xf32, #tpu.memory_space<vmem>>, %arg5: memref<1x4xf32, #tpu.memory_space<vmem>>, %arg6: memref<128x4xf32, #tpu.memory_space<vmem>>) attributes {dimension_semantics = [#tpu.dimension_semantics<parallel>], iteration_bounds = array<i64: 2>, scalar_prefetch = 0 : i64, scratch_operands = 0 : i64, tpu.core_type = #tpu.core_type<tc>, window_params = [{transform_indices = @transform_0, window_bounds = array<i64: 128, 32>}, {pipeline_mode = #tpu.pipeline_mode<synchronous>, transform_indices = @transform_1, window_bounds = array<i64: 32, 16>}, {pipeline_mode = #tpu.pipeline_mode<synchronous>, transform_indices = @transform_2, window_bounds = array<i64: 1, 16>}, {pipeline_mode = #tpu.pipeline_mode<synchronous>, transform_indices = @transform_3, window_bounds = array<i64: 16, 4>}, {pipeline_mode = #tpu.pipeline_mode<synchronous>, transform_indices = @transform_4, window_bounds = array<i64: 1, 4>}, {transform_indices = @transform_5, window_bounds = array<i64: 128, 4>}]} {
    %c0 = arith.constant 0 : index
    %c0_0 = arith.constant 0 : index
    %0 = vector.load %arg1[%c0, %c0_0] : memref<128x32xf32, #tpu.memory_space<vmem>>, vector<128x32xf32>
    %c0_1 = arith.constant 0 : index
    %c0_2 = arith.constant 0 : index
    %1 = vector.load %arg2[%c0_1, %c0_2] : memref<32x16xf32, #tpu.memory_space<vmem>>, vector<32x16xf32>
    %cst = arith.constant dense<0.000000e+00> : vector<128x16xf32>
    %2 = tpu.matmul %0, %1, %cst {dimension_numbers = #tpu.dot_dimension_numbers<[1], [0], [0], [1], [0, 0, 1, 1], [], []>} : vector<128x32xf32>, vector<32x16xf32>, vector<128x16xf32> -> vector<128x16xf32>
    %c0_3 = arith.constant 0 : index
    %c0_4 = arith.constant 0 : index
    %3 = vector.load %arg3[%c0_3, %c0_4] : memref<1x16xf32, #tpu.memory_space<vmem>>, vector<1x16xf32>
    %4 = vector.broadcast %3 : vector<1x16xf32> to vector<128x16xf32>
    %5 = arith.addf %2, %4 : vector<128x16xf32>
    %6 = math.tanh %5 : vector<128x16xf32>
    %c0_5 = arith.constant 0 : index
    %c0_6 = arith.constant 0 : index
    %7 = vector.load %arg4[%c0_5, %c0_6] : memref<16x4xf32, #tpu.memory_space<vmem>>, vector<16x4xf32>
    %cst_7 = arith.constant dense<0.000000e+00> : vector<128x4xf32>
    %8 = tpu.matmul %6, %7, %cst_7 {dimension_numbers = #tpu.dot_dimension_numbers<[1], [0], [0], [1], [0, 0, 1, 1], [], []>} : vector<128x16xf32>, vector<16x4xf32>, vector<128x4xf32> -> vector<128x4xf32>
    %c0_8 = arith.constant 0 : index
    %c0_9 = arith.constant 0 : index
    %9 = vector.load %arg5[%c0_8, %c0_9] : memref<1x4xf32, #tpu.memory_space<vmem>>, vector<1x4xf32>
    %10 = vector.broadcast %9 : vector<1x4xf32> to vector<128x4xf32>
    %11 = arith.addf %8, %10 : vector<128x4xf32>
    %c0_10 = arith.constant 0 : index
    %c0_11 = arith.constant 0 : index
    %12 = vector.load %arg6[%c0_10, %c0_11] : memref<128x4xf32, #tpu.memory_space<vmem>>, vector<128x4xf32>
    tpu.vector_store %arg6[%c0_10, %c0_11], %11 {strides = array<i32>} : memref<128x4xf32, #tpu.memory_space<vmem>>, vector<128x4xf32>,
    return
  }
  func.func @transform_0(%arg0: i32) -> (i32, i32) {
    %c0_i32 = arith.constant 0 : i32
    %c0_i32_0 = arith.constant 0 : i32
    return %arg0, %c0_i32 : i32, i32
  }
  func.func @transform_1(%arg0: i32) -> (i32, i32) {
    %c0_i32 = arith.constant 0 : i32
    %c0_i32_0 = arith.constant 0 : i32
    %c0_i32_1 = arith.constant 0 : i32
    return %c0_i32, %c0_i32_0 : i32, i32
  }
  func.func @transform_2(%arg0: i32) -> (i32, i32) {
    %c0_i32 = arith.constant 0 : i32
    %c0_i32_0 = arith.constant 0 : i32
    %c0_i32_1 = arith.constant 0 : i32
    return %c0_i32, %c0_i32_0 : i32, i32
  }
  func.func @transform_3(%arg0: i32) -> (i32, i32) {
    %c0_i32 = arith.constant 0 : i32
    %c0_i32_0 = arith.constant 0 : i32
    %c0_i32_1 = arith.constant 0 : i32
    return %c0_i32, %c0_i32_0 : i32, i32
  }
  func.func @transform_4(%arg0: i32) -> (i32, i32) {
    %c0_i32 = arith.constant 0 : i32
    %c0_i32_0 = arith.constant 0 : i32
    %c0_i32_1 = arith.constant 0 : i32
    return %c0_i32, %c0_i32_0 : i32, i32
  }
  func.func @transform_5(%arg0: i32) -> (i32, i32) {
    %c0_i32 = arith.constant 0 : i32
    %c0_i32_0 = arith.constant 0 : i32
    return %arg0, %c0_i32 : i32, i32
  }
}

</mosaic_0001>

<llo_original>
// kernel: rl_net_test_forward.1
$region0: #{rl_net_test_forward.1}
  #allocation0 [shape = 'u32[]', space=smem, size = 0x4, offset = 0x4, fixed_abs, tag = 'smem constant byte address 0x4 - core index']
  #allocation1 [shape = 'u32[144,128]{1,0:T(1,128)}', space=vmem, size = 0x12000, scoped, tag = 'internal scratch']
  %s0 = inlined_call_operand.vmem [shape: f32[256,32], index: 0, kind: input, shape index: {}]
  %s1 = inlined_call_operand.vmem [shape: f32[32,16], index: 1, kind: input, shape index: {}]
  %s2 = inlined_call_operand.vmem [shape: f32[1,16], index: 2, kind: input, shape index: {}]
  %s3 = inlined_call_operand.vmem [shape: f32[16,4], index: 3, kind: input, shape index: {}]
  %s4 = inlined_call_operand.vmem [shape: f32[1,4], index: 4, kind: input, shape index: {}]
  %s5 = inlined_call_operand.vmem [shape: f32[256,4], index: 5, kind: output, shape index: {}]
  %s6 = sld [smem:[#allocation0]]
  $region53: #{rl_net_test_forward.1} parent=0
    _
  %s8 = ssub.s32 1, %s6
  %s9 = scalar_select 0, %s8, %s6
  loop: start=0, step=1, limit=4
  $region2: #{rl_net_test_forward.1} parent=0 // loop_pre_header
    _
  $region3: #{rl_net_test_forward.1} parent=0 // loop_header
    %s11 = sphi 0, %s15
    %p12 = scmp.ge.s32.totalorder %s11, 4
    %s21 = sphi 0, %s23
    %s24 = sphi 0, %s21
    %s25 = sphi 0, %s24
    %s41 = sphi 0, %s25
    %s45 = sphi 0, %s45
    %s47 = sphi 0, %s45
    %s48 = sphi 0, %s47
    %s62 = sphi 0, %s48
    %s66 = sphi 0, %s66
    %s68 = sphi 0, %s66
    %s69 = sphi 0, %s68
    %s83 = sphi 0, %s69
    %s87 = sphi 0, %s87
    %s89 = sphi 0, %s87
    %s90 = sphi 0, %s89
    %s104 = sphi 0, %s90
    %s108 = sphi 0, %s108
    %s110 = sphi 0, %s108
    %s111 = sphi 0, %s110
    %s125 = sphi 0, %s111
    %s131 = sphi 0, %s133
    %s134 = sphi 0, %s131
    %s135 = sphi 0, %s134
    %s151 = sphi 0, %s135
  $region4: #{rl_net_test_forward.1} parent=0 // loop_header_branch
    %14 = sbr.rel (%p12) target = $region8
  $region5: #{rl_net_test_forward.1} parent=0 // loop_body
    %s16 = ssub.s32 %s11, 1
    %s17 = ssub.s32 %s11, 2
    %s18 = sadd.s32 %s11, 1
    %s19 = ssub.s32 %s11, %s18
    %p20 = scmp.eq.s32.totalorder %s19, 0
    %s22 = sadd.s32 %s21, 1
    %s23 = scalar_select %p20, %s21, %s22
    %p26 = pneg %p20
    %p27 = scmp.eq.s32.totalorder %s11, 1
    %p28 = por %p26, %p27
    %p29 = scmp.ne.s32.totalorder %s21, %s24
    %p30 = scmp.eq.s32.totalorder %s11, 0
    %p31 = por %p29, %p30
    %p32 = scmp.ne.s32.totalorder %s21, %s24
    %p33 = scmp.eq.s32.totalorder %s16, 1
    %p34 = por %p32, %p33
    %p35 = scmp.ne.s32.totalorder %s24, %s25
    %p36 = scmp.eq.s32.totalorder %s16, 0
    %p37 = por %p35, %p36
    %p38 = scmp.ne.s32.totalorder %s24, %s25
    %p39 = scmp.eq.s32.totalorder %s17, 1
    %p40 = por %p38, %p39
    %p42 = scmp.ne.s32.totalorder %s25, %s41
    %p43 = scmp.eq.s32.totalorder %s17, 0
    %p44 = por %p42, %p43
    %s46 = sadd.s32 %s45, 1
    %p49 = scmp.eq.s32.totalorder %s11, 1
    %p50 = scmp.ne.s32.totalorder %s45, %s47
    %p51 = scmp.eq.s32.totalorder %s11, 0
    %p52 = por %p50, %p51
    %p53 = scmp.ne.s32.totalorder %s45, %s47
    %p54 = scmp.eq.s32.totalorder %s16, 1
    %p55 = por %p53, %p54
    %p56 = scmp.ne.s32.totalorder %s47, %s48
    %p57 = scmp.eq.s32.totalorder %s16, 0
    %p58 = por %p56, %p57
    %p59 = scmp.ne.s32.totalorder %s47, %s48
    %p60 = scmp.eq.s32.totalorder %s17, 1
    %p61 = por %p59, %p60
    %p63 = scmp.ne.s32.totalorder %s48, %s62
    %p64 = scmp.eq.s32.totalorder %s17, 0
    %p65 = por %p63, %p64
    %s67 = sadd.s32 %s66, 1
    %p70 = scmp.eq.s32.totalorder %s11, 1
    %p71 = scmp.ne.s32.totalorder %s66, %s68
    %p72 = scmp.eq.s32.totalorder %s11, 0
    %p73 = por %p71, %p72
    %p74 = scmp.ne.s32.totalorder %s66, %s68
    %p75 = scmp.eq.s32.totalorder %s16, 1
    %p76 = por %p74, %p75
    %p77 = scmp.ne.s32.totalorder %s68, %s69
    %p78 = scmp.eq.s32.totalorder %s16, 0
    %p79 = por %p77, %p78
    %p80 = scmp.ne.s32.totalorder %s68, %s69
    %p81 = scmp.eq.s32.totalorder %s17, 1
    %p82 = por %p80, %p81
    %p84 = scmp.ne.s32.totalorder %s69, %s83
    %p85 = scmp.eq.s32.totalorder %s17, 0
    %p86 = por %p84, %p85
    %s88 = sadd.s32 %s87, 1
    %p91 = scmp.eq.s32.totalorder %s11, 1
    %p92 = scmp.ne.s32.totalorder %s87, %s89
    %p93 = scmp.eq.s32.totalorder %s11, 0
    %p94 = por %p92, %p93
    %p95 = scmp.ne.s32.totalorder %s87, %s89
    %p96 = scmp.eq.s32.totalorder %s16, 1
    %p97 = por %p95, %p96
    %p98 = scmp.ne.s32.totalorder %s89, %s90
    %p99 = scmp.eq.s32.totalorder %s16, 0
    %p100 = por %p98, %p99
    %p101 = scmp.ne.s32.totalorder %s89, %s90
    %p102 = scmp.eq.s32.totalorder %s17, 1
    %p103 = por %p101, %p102
    %p105 = scmp.ne.s32.totalorder %s90, %s104
    %p106 = scmp.eq.s32.totalorder %s17, 0
    %p107 = por %p105, %p106
    %s109 = sadd.s32 %s108, 1
    %p112 = scmp.eq.s32.totalorder %s11, 1
    %p113 = scmp.ne.s32.totalorder %s108, %s110
    %p114 = scmp.eq.s32.totalorder %s11, 0
    %p115 = por %p113, %p114
    %p116 = scmp.ne.s32.totalorder %s108, %s110
    %p117 = scmp.eq.s32.totalorder %s16, 1
    %p118 = por %p116, %p117
    %p119 = scmp.ne.s32.totalorder %s110, %s111
    %p120 = scmp.eq.s32.totalorder %s16, 0
    %p121 = por %p119, %p120
    %p122 = scmp.ne.s32.totalorder %s110, %s111
    %p123 = scmp.eq.s32.totalorder %s17, 1
    %p124 = por %p122, %p123
    %p126 = scmp.ne.s32.totalorder %s111, %s125
    %p127 = scmp.eq.s32.totalorder %s17, 0
    %p128 = por %p126, %p127
    %s129 = ssub.s32 %s11, %s18
    %p130 = scmp.eq.s32.totalorder %s129, 0
    %s132 = sadd.s32 %s131, 1
    %s133 = scalar_select %p130, %s131, %s132
    %p136 = pneg %p130
    %p137 = scmp.eq.s32.totalorder %s11, 1
    %p138 = por %p136, %p137
    %p139 = scmp.ne.s32.totalorder %s131, %s134
    %p140 = scmp.eq.s32.totalorder %s11, 0
    %p141 = por %p139, %p140
    %p142 = scmp.ne.s32.totalorder %s131, %s134
    %p143 = scmp.eq.s32.totalorder %s16, 1
    %p144 = por %p142, %p143
    %p145 = scmp.ne.s32.totalorder %s134, %s135
    %p146 = scmp.eq.s32.totalorder %s16, 0
    %p147 = por %p145, %p146
    %p148 = scmp.ne.s32.totalorder %s134, %s135
    %p149 = scmp.eq.s32.totalorder %s17, 1
    %p150 = por %p148, %p149
    %p152 = scmp.ne.s32.totalorder %s135, %s151
    %p153 = scmp.eq.s32.totalorder %s17, 0
    %p154 = por %p152, %p153
    %p155 = scmp.le.s32.totalorder 1, %s11
    %p156 = scmp.lt.s32.totalorder %s11, 3
    %p157 = pnand %p155, %p156
    %p158 = pneg %p157
    // Predicated region
    $region9: #{rl_net_test_forward.1} parent=5 // pred_check
      _
    $region10: #{rl_net_test_forward.1} parent=5 // pred_check_branch
      %160 = sbr.rel (%p157) target = $region12
    $region11: #{rl_net_test_forward.1} parent=5 // pred_region
      %s161 = ssub.s32 %s11, 1
      // Predicated region
      $region13: #{rl_net_test_forward.1} parent=11 // pred_check
        %p162 = pneg %p58
      $region14: #{rl_net_test_forward.1} parent=11 // pred_check_branch
        %164 = sbr.rel (%p162) target = $region16
      $region15: #{rl_net_test_forward.1} parent=11 // pred_region
        _
      $region16: #{rl_net_test_forward.1} parent=11 // pred_fallthru
        _
      // Predicated region
      $region17: #{rl_net_test_forward.1} parent=11 // pred_check
        %p165 = pneg %p79
      $region18: #{rl_net_test_forward.1} parent=11 // pred_check_branch
        %167 = sbr.rel (%p165) target = $region20
      $region19: #{rl_net_test_forward.1} parent=11 // pred_region
        _
      $region20: #{rl_net_test_forward.1} parent=11 // pred_fallthru
        _
      // Predicated region
      $region21: #{rl_net_test_forward.1} parent=11 // pred_check
        %p168 = pneg %p100
      $region22: #{rl_net_test_forward.1} parent=11 // pred_check_branch
        %170 = sbr.rel (%p168) target = $region24
      $region23: #{rl_net_test_forward.1} parent=11 // pred_region
        _
      $region24: #{rl_net_test_forward.1} parent=11 // pred_fallthru
        _
      // Predicated region
      $region25: #{rl_net_test_forward.1} parent=11 // pred_check
        %p171 = pneg %p121
      $region26: #{rl_net_test_forward.1} parent=11 // pred_check_branch
        %173 = sbr.rel (%p171) target = $region28
      $region27: #{rl_net_test_forward.1} parent=11 // pred_region
        _
      $region28: #{rl_net_test_forward.1} parent=11 // pred_fallthru
        _
    $region12: #{rl_net_test_forward.1} parent=5 // pred_fallthru
      _
    %p174 = scmp.lt.s32.totalorder %s11, 2
    // Predicated region
    $region29: #{rl_net_test_forward.1} parent=5 // pred_check
      %p175 = pneg %p174
    $region30: #{rl_net_test_forward.1} parent=5 // pred_check_branch
      %177 = sbr.rel (%p175) target = $region32
    $region31: #{rl_net_test_forward.1} parent=5 // pred_region
      // Predicated region
      $region33: #{rl_net_test_forward.1} parent=31 // pred_check
        %p178 = pneg %p31
      $region34: #{rl_net_test_forward.1} parent=31 // pred_check_branch
        %180 = sbr.rel (%p178) target = $region36
      $region35: #{rl_net_test_forward.1} parent=31 // pred_region
        %s181 = smul.u32 16, %s11
        %p182 = scmp.lt.s32.totalorder %s181, 31
        %s183 = scalar_select %p182, %s181, 31
        %s184 = smul.addr %s183, 8
        %s185 = scalar_lea.vmem %s0, %s184
        %s186 = smul.u32 16, %s11
      $region36: #{rl_net_test_forward.1} parent=31 // pred_fallthru
        _
    $region32: #{rl_net_test_forward.1} parent=5 // pred_fallthru
      _
    %p187 = scmp.le.s32.totalorder 1, %s11
    %p188 = scmp.lt.s32.totalorder %s11, 3
    %p189 = pnand %p187, %p188
    %p190 = pneg %p189
    // Predicated region
    $region37: #{rl_net_test_forward.1} parent=5 // pred_check
      _
    $region38: #{rl_net_test_forward.1} parent=5 // pred_check_branch
      %192 = sbr.rel (%p189) target = $region40
    $region39: #{rl_net_test_forward.1} parent=5 // pred_region
      %s193 = ssub.s32 %s11, 1
      %s194 = smul.u32 16, %s16
      %p195 = scmp.lt.s32.totalorder %s194, 31
      %s196 = scalar_select %p195, %s194, 31
      %s197 = smul.addr %s196, 8
      %s198 = scalar_lea.vmem %s0, %s197
      %p199 = pneg %p37
      %p200 = pneg %p34
      %p201 = pneg %p58
      %p202 = pneg %p55
      %p203 = pneg %p79
      %p204 = pneg %p76
      %p205 = pneg %p100
      %p206 = pneg %p97
      %p207 = pneg %p121
      %p208 = pneg %p118
      %p209 = pneg %p147
      %p210 = pneg %p144
      %s211 = smul.u32 16, %s16
      %p212 = scmp.lt.s32.totalorder %s211, 31
      %s213 = scalar_select %p212, %s211, 31
      %s214 = smul.addr %s213, 8
      %s215 = scalar_lea.vmem %s5, %s214
      %s216 = smul.u32 16, %s16
      %p217 = scmp.lt.s32.totalorder %s216, 31
      %s218 = scalar_select %p217, %s216, 31
      %s219 = smul.addr %s218, 8
      %s220 = scalar_lea.vmem %s0, %s219
      %s221 = smul.u32 16, %s16
      %s222 = smul.u32 16, %s16
      %p223 = scmp.lt.s32.totalorder %s222, 31
      %s224 = scalar_select %p223, %s222, 31
      %s225 = smul.addr %s224, 8
      %s226 = scalar_lea.vmem %s5, %s225
      %s227 = smul.u32 16, %s16
      %v228 = vld [vmem:[%s220] sm:$0xff]
      %v229 = vld [vmem:[%s220 + $0x8] sm:$0xff]
      %v230 = vld [vmem:[%s220 + $0x10] sm:$0xff]
      %v231 = vld [vmem:[%s220 + $0x18] sm:$0xff]
      %v232 = vld [vmem:[%s220 + $0x20] sm:$0xff]
      %v233 = vld [vmem:[%s220 + $0x28] sm:$0xff]
      %v234 = vld [vmem:[%s220 + $0x30] sm:$0xff]
      %v235 = vld [vmem:[%s220 + $0x38] sm:$0xff]
      %v236 = vld [vmem:[%s220 + $0x40] sm:$0xff]
      %v237 = vld [vmem:[%s220 + $0x48] sm:$0xff]
      %v238 = vld [vmem:[%s220 + $0x50] sm:$0xff]
      %v239 = vld [vmem:[%s220 + $0x58] sm:$0xff]
      %v240 = vld [vmem:[%s220 + $0x60] sm:$0xff]
      %v241 = vld [vmem:[%s220 + $0x68] sm:$0xff]
      %v242 = vld [vmem:[%s220 + $0x70] sm:$0xff]
      %v243 = vld [vmem:[%s220 + $0x78] sm:$0xff]
      %v244 = vld [vmem:[%s1] sm:$0xff]
      %v245 = vld [vmem:[%s1 + $0x8] sm:$0xff]
      %v246 = vld [vmem:[%s1 + $0x10] sm:$0xff]
      %v247 = vld [vmem:[%s1 + $0x18] sm:$0xff]
      %v248 = vld [vmem:[%s2] sm:$0x1]
      %v250 = vlaneseq
      %v251 = vshrl.u32 %v250, 7
      %v252 = vsub.s32 0, %v251
      %v253 = vrot.slane %v248, %v252
      %vm255 = vcmask 261120
      %v257 = vsel %vm255, %v228, 0
      %v260 = vsel %vm255, %v229, 0
      %v263 = vsel %vm255, %v230, 0
      %v266 = vsel %vm255, %v231, 0
      %v269 = vsel %vm255, %v232, 0
      %v272 = vsel %vm255, %v233, 0
      %v275 = vsel %vm255, %v234, 0
      %v278 = vsel %vm255, %v235, 0
      %v281 = vsel %vm255, %v236, 0
      %v284 = vsel %vm255, %v237, 0
      %v287 = vsel %vm255, %v238, 0
      %v290 = vsel %vm255, %v239, 0
      %v293 = vsel %vm255, %v240, 0
      %v296 = vsel %vm255, %v241, 0
      %v299 = vsel %vm255, %v242, 0
      %v302 = vsel %vm255, %v243, 0
      %304 = vmatprep.subr.mxu0 0.0
      %305 = vmatpush1.msra.mxu0 0.0
      %306 = vmatprep.subr.mxu0 0.0
      %307 = vmatpush1.msra.mxu0 0.0
      %308 = vmatprep.subr.mxu0 0.0
      %309 = vmatpush1.msra.mxu0 0.0
      %310 = vmatprep.subr.mxu0 0.0
      %311 = vmatpush1.msra.mxu0 0.0
      %312 = vmatprep.subr.mxu0 0.0
      %313 = vmatpush1.msra.mxu0 0.0
      %314 = vmatprep.subr.mxu0 0.0
      %315 = vmatpush1.msra.mxu0 0.0
      %316 = vmatprep.subr.mxu0 0.0
      %317 = vmatpush1.msra.mxu0 0.0
      %318 = vmatprep.subr.mxu0 0.0
      %319 = vmatpush1.msra.mxu0 0.0
      %320 = vmatprep.subr.mxu0 0.0
      %321 = vmatpush1.msra.mxu0 0.0
      %322 = vmatprep.subr.mxu0 0.0
      %323 = vmatpush1.msra.mxu0 0.0
      %324 = vmatprep.subr.mxu0 0.0
      %325 = vmatpush1.msra.mxu0 0.0
      %326 = vmatprep.subr.mxu0 0.0
      %327 = vmatpush1.msra.mxu0 0.0
      %328 = vmatprep.subr.mxu0 0.0
      %329 = vmatpush1.msra.mxu0 %v247
      %330 = vmatprep.subr.mxu0 0.0
      %331 = vmatpush1.msra.mxu0 %v246
      %332 = vmatprep.subr.mxu0 0.0
      %333 = vmatpush1.msra.mxu0 %v245
      %334 = vmatprep.subr.mxu0 0.0
      %335 = vmatpush1.msra.mxu0 %v244
      %336 = vmatprep.subr.mxu0 0.0
      %337 = vmatpush2.msra.mxu0 0.0
      %338 = vmatprep.subr.mxu0 0.0
      %339 = vmatpush2.msra.mxu0 0.0
      %340 = vmatprep.subr.mxu0 0.0
      %341 = vmatpush2.msra.mxu0 0.0
      %342 = vmatprep.subr.mxu0 0.0
      %343 = vmatpush2.msra.mxu0 0.0
      %344 = vmatprep.subr.mxu0 0.0
      %345 = vmatpush2.msra.mxu0 0.0
      %346 = vmatprep.subr.mxu0 0.0
      %347 = vmatpush2.msra.mxu0 0.0
      %348 = vmatprep.subr.mxu0 0.0
      %349 = vmatpush2.msra.mxu0 0.0
      %350 = vmatprep.subr.mxu0 0.0
      %351 = vmatpush2.msra.mxu0 0.0
      %352 = vmatprep.subr.mxu0 0.0
      %353 = vmatpush2.msra.mxu0 0.0
      %354 = vmatprep.subr.mxu0 0.0
      %355 = vmatpush2.msra.mxu0 0.0
      %356 = vmatprep.subr.mxu0 0.0
      %357 = vmatpush2.msra.mxu0 0.0
      %358 = vmatprep.subr.mxu0 0.0
      %359 = vmatpush2.msra.mxu0 0.0
      %360 = vmatprep.subr.mxu0 0.0
      %361 = vmatpush2.msra.mxu0 0.0
      %362 = vmatprep.subr.mxu0 0.0
      %363 = vmatpush2.msra.mxu0 0.0
      %364 = vmatprep.subr.mxu0 0.0
      %365 = vmatpush2.msra.mxu0 0.0
      %366 = vmatprep.subr.mxu0 0.0
      %367 = vmatpush2.msra.mxu0 0.0
      %368 = vmatprep.mubr.f32.mxu0 0.0
      %369 = vmatmul.mubr.f32.gmra.mxu0 %v257
      %v370 = vpop.f32.mrf.mxu0
      %v371 = vadd.f32 %v253, %v370
      %v372 = vpop.f32.mrf.mxu0
      %373 = vmatprep.mubr.f32.mxu0 0.0
      %374 = vmatmul.mubr.f32.gmra.mxu0 %v260
      %v375 = vpop.f32.mrf.mxu0
      %v376 = vadd.f32 %v253, %v375
      %v377 = vpop.f32.mrf.mxu0
      %378 = vmatprep.mubr.f32.mxu0 0.0
      %379 = vmatmul.mubr.f32.gmra.mxu0 %v263
      %v380 = vpop.f32.mrf.mxu0
      %v381 = vadd.f32 %v253, %v380
      %v382 = vpop.f32.mrf.mxu0
      %383 = vmatprep.mubr.f32.mxu0 0.0
      %384 = vmatmul.mubr.f32.gmra.mxu0 %v266
      %v385 = vpop.f32.mrf.mxu0
      %v386 = vadd.f32 %v253, %v385
      %v387 = vpop.f32.mrf.mxu0
      %388 = vmatprep.mubr.f32.mxu0 0.0
      %389 = vmatmul.mubr.f32.gmra.mxu0 %v269
      %v390 = vpop.f32.mrf.mxu0
      %v391 = vadd.f32 %v253, %v390
      %v392 = vpop.f32.mrf.mxu0
      %393 = vmatprep.mubr.f32.mxu0 0.0
      %394 = vmatmul.mubr.f32.gmra.mxu0 %v272
      %v395 = vpop.f32.mrf.mxu0
      %v396 = vadd.f32 %v253, %v395
      %v397 = vpop.f32.mrf.mxu0
      %398 = vmatprep.mubr.f32.mxu0 0.0
      %399 = vmatmul.mubr.f32.gmra.mxu0 %v275
      %v400 = vpop.f32.mrf.mxu0
      %v401 = vadd.f32 %v253, %v400
      %v402 = vpop.f32.mrf.mxu0
      %403 = vmatprep.mubr.f32.mxu0 0.0
      %404 = vmatmul.mubr.f32.gmra.mxu0 %v278
      %v405 = vpop.f32.mrf.mxu0
      %v406 = vadd.f32 %v253, %v405
      %v407 = vpop.f32.mrf.mxu0
      %408 = vmatprep.mubr.f32.mxu0 0.0
      %409 = vmatmul.mubr.f32.gmra.mxu0 %v281
      %v410 = vpop.f32.mrf.mxu0
      %v411 = vadd.f32 %v253, %v410
      %v412 = vpop.f32.mrf.mxu0
      %413 = vmatprep.mubr.f32.mxu0 0.0
      %414 = vmatmul.mubr.f32.gmra.mxu0 %v284
      %v415 = vpop.f32.mrf.mxu0
      %v416 = vadd.f32 %v253, %v415
      %v417 = vpop.f32.mrf.mxu0
      %418 = vmatprep.mubr.f32.mxu0 0.0
      %419 = vmatmul.mubr.f32.gmra.mxu0 %v287
      %v420 = vpop.f32.mrf.mxu0
      %v421 = vadd.f32 %v253, %v420
      %v422 = vpop.f32.mrf.mxu0
      %423 = vmatprep.mubr.f32.mxu0 0.0
      %424 = vmatmul.mubr.f32.gmra.mxu0 %v290
      %v425 = vpop.f32.mrf.mxu0
      %v426 = vadd.f32 %v253, %v425
      %v427 = vpop.f32.mrf.mxu0
      %428 = vmatprep.mubr.f32.mxu0 0.0
      %429 = vmatmul.mubr.f32.gmra.mxu0 %v293
      %v430 = vpop.f32.mrf.mxu0
      %v431 = vadd.f32 %v253, %v430
      %v432 = vpop.f32.mrf.mxu0
      %433 = vmatprep.mubr.f32.mxu0 0.0
      %434 = vmatmul.mubr.f32.gmra.mxu0 %v296
      %v435 = vpop.f32.mrf.mxu0
      %v436 = vadd.f32 %v253, %v435
      %v437 = vpop.f32.mrf.mxu0
      %438 = vmatprep.mubr.f32.mxu0 0.0
      %439 = vmatmul.mubr.f32.gmra.mxu0 %v299
      %v440 = vpop.f32.mrf.mxu0
      %v441 = vadd.f32 %v253, %v440
      %v442 = vpop.f32.mrf.mxu0
      %443 = vmatprep.mubr.f32.mxu0 0.0
      %444 = vmatmul.mubr.f32.gmra.mxu0 %v302
      %v445 = vpop.f32.mrf.mxu0
      %v446 = vadd.f32 %v253, %v445
      %v447 = vpop.f32.mrf.mxu0
      %448 = vdwg.mxu0
      %v449 = vtanh.pop %v371
      %v450 = vtanh.pop %v376
      %v451 = vtanh.pop %v381
      %v452 = vtanh.pop %v386
      %v453 = vtanh.pop %v391
      %v454 = vtanh.pop %v396
      %v455 = vtanh.pop %v401
      %v456 = vtanh.pop %v406
      %v457 = vtanh.pop %v411
      %v458 = vtanh.pop %v416
      %v459 = vtanh.pop %v421
      %v460 = vtanh.pop %v426
      %v461 = vtanh.pop %v431
      %v462 = vtanh.pop %v436
      %v463 = vtanh.pop %v441
      %v464 = vtanh.pop %v446
      %v465 = vld [vmem:[%s3] sm:$0xff]
      %v466 = vld [vmem:[%s3 + $0x8] sm:$0xff]
      %v467 = vld [vmem:[%s4] sm:$0x1]
      %v469 = vlaneseq
      %v470 = vshrl.u32 %v469, 7
      %v471 = vsub.s32 0, %v470
      %v472 = vrot.slane %v467, %v471
      %vm474 = vcmask 130048
      %v476 = vsel %vm474, %v449, 0
      %v479 = vsel %vm474, %v450, 0
      %v482 = vsel %vm474, %v451, 0
      %v485 = vsel %vm474, %v452, 0
      %v488 = vsel %vm474, %v453, 0
      %v491 = vsel %vm474, %v454, 0
      %v494 = vsel %vm474, %v455, 0
      %v497 = vsel %vm474, %v456, 0
      %v500 = vsel %vm474, %v457, 0
      %v503 = vsel %vm474, %v458, 0
      %v506 = vsel %vm474, %v459, 0
      %v509 = vsel %vm474, %v460, 0
      %v512 = vsel %vm474, %v461, 0
      %v515 = vsel %vm474, %v462, 0
      %v518 = vsel %vm474, %v463, 0
      %v521 = vsel %vm474, %v464, 0
      %523 = vmatprep.subr.mxu0 0.0
      %524 = vmatpush1.msra.mxu0 0.0
      %525 = vmatprep.subr.mxu0 0.0
      %526 = vmatpush1.msra.mxu0 0.0
      %527 = vmatprep.subr.mxu0 0.0
      %528 = vmatpush1.msra.mxu0 0.0
      %529 = vmatprep.subr.mxu0 0.0
      %530 = vmatpush1.msra.mxu0 0.0
      %531 = vmatprep.subr.mxu0 0.0
      %532 = vmatpush1.msra.mxu0 0.0
      %533 = vmatprep.subr.mxu0 0.0
      %534 = vmatpush1.msra.mxu0 0.0
      %535 = vmatprep.subr.mxu0 0.0
      %536 = vmatpush1.msra.mxu0 0.0
      %537 = vmatprep.subr.mxu0 0.0
      %538 = vmatpush1.msra.mxu0 0.0
      %539 = vmatprep.subr.mxu0 0.0
      %540 = vmatpush1.msra.mxu0 0.0
      %541 = vmatprep.subr.mxu0 0.0
      %542 = vmatpush1.msra.mxu0 0.0
      %543 = vmatprep.subr.mxu0 0.0
      %544 = vmatpush1.msra.mxu0 0.0
      %545 = vmatprep.subr.mxu0 0.0
      %546 = vmatpush1.msra.mxu0 0.0
      %547 = vmatprep.subr.mxu0 0.0
      %548 = vmatpush1.msra.mxu0 0.0
      %549 = vmatprep.subr.mxu0 0.0
      %550 = vmatpush1.msra.mxu0 0.0
      %551 = vmatprep.subr.mxu0 0.0
      %552 = vmatpush1.msra.mxu0 %v466
      %553 = vmatprep.subr.mxu0 0.0
      %554 = vmatpush1.msra.mxu0 %v465
      %555 = vmatprep.subr.mxu0 0.0
      %556 = vmatpush2.msra.mxu0 0.0
      %557 = vmatprep.subr.mxu0 0.0
      %558 = vmatpush2.msra.mxu0 0.0
      %559 = vmatprep.subr.mxu0 0.0
      %560 = vmatpush2.msra.mxu0 0.0
      %561 = vmatprep.subr.mxu0 0.0
      %562 = vmatpush2.msra.mxu0 0.0
      %563 = vmatprep.subr.mxu0 0.0
      %564 = vmatpush2.msra.mxu0 0.0
      %565 = vmatprep.subr.mxu0 0.0
      %566 = vmatpush2.msra.mxu0 0.0
      %567 = vmatprep.subr.mxu0 0.0
      %568 = vmatpush2.msra.mxu0 0.0
      %569 = vmatprep.subr.mxu0 0.0
      %570 = vmatpush2.msra.mxu0 0.0
      %571 = vmatprep.subr.mxu0 0.0
      %572 = vmatpush2.msra.mxu0 0.0
      %573 = vmatprep.subr.mxu0 0.0
      %574 = vmatpush2.msra.mxu0 0.0
      %575 = vmatprep.subr.mxu0 0.0
      %576 = vmatpush2.msra.mxu0 0.0
      %577 = vmatprep.subr.mxu0 0.0
      %578 = vmatpush2.msra.mxu0 0.0
      %579 = vmatprep.subr.mxu0 0.0
      %580 = vmatpush2.msra.mxu0 0.0
      %581 = vmatprep.subr.mxu0 0.0
      %582 = vmatpush2.msra.mxu0 0.0
      %583 = vmatprep.subr.mxu0 0.0
      %584 = vmatpush2.msra.mxu0 0.0
      %585 = vmatprep.subr.mxu0 0.0
      %586 = vmatpush2.msra.mxu0 0.0
      %587 = vmatprep.mubr.f32.mxu0 0.0
      %588 = vmatmul.mubr.f32.gmra.mxu0 %v476
      %v589 = vpop.f32.mrf.mxu0
      %v590 = vadd.f32 %v472, %v589
      %v591 = vpop.f32.mrf.mxu0
      %592 = vmatprep.mubr.f32.mxu0 0.0
      %593 = vmatmul.mubr.f32.gmra.mxu0 %v479
      %v594 = vpop.f32.mrf.mxu0
      %v595 = vadd.f32 %v472, %v594
      %v596 = vpop.f32.mrf.mxu0
      %597 = vmatprep.mubr.f32.mxu0 0.0
      %598 = vmatmul.mubr.f32.gmra.mxu0 %v482
      %v599 = vpop.f32.mrf.mxu0
      %v600 = vadd.f32 %v472, %v599
      %v601 = vpop.f32.mrf.mxu0
      %602 = vmatprep.mubr.f32.mxu0 0.0
      %603 = vmatmul.mubr.f32.gmra.mxu0 %v485
      %v604 = vpop.f32.mrf.mxu0
      %v605 = vadd.f32 %v472, %v604
      %v606 = vpop.f32.mrf.mxu0
      %607 = vmatprep.mubr.f32.mxu0 0.0
      %608 = vmatmul.mubr.f32.gmra.mxu0 %v488
      %v609 = vpop.f32.mrf.mxu0
      %v610 = vadd.f32 %v472, %v609
      %v611 = vpop.f32.mrf.mxu0
      %612 = vmatprep.mubr.f32.mxu0 0.0
      %613 = vmatmul.mubr.f32.gmra.mxu0 %v491
      %v614 = vpop.f32.mrf.mxu0
      %v615 = vadd.f32 %v472, %v614
      %v616 = vpop.f32.mrf.mxu0
      %617 = vmatprep.mubr.f32.mxu0 0.0
      %618 = vmatmul.mubr.f32.gmra.mxu0 %v494
      %v619 = vpop.f32.mrf.mxu0
      %v620 = vadd.f32 %v472, %v619
      %v621 = vpop.f32.mrf.mxu0
      %622 = vmatprep.mubr.f32.mxu0 0.0
      %623 = vmatmul.mubr.f32.gmra.mxu0 %v497
      %v624 = vpop.f32.mrf.mxu0
      %v625 = vadd.f32 %v472, %v624
      %v626 = vpop.f32.mrf.mxu0
      %627 = vmatprep.mubr.f32.mxu0 0.0
      %628 = vmatmul.mubr.f32.gmra.mxu0 %v500
      %v629 = vpop.f32.mrf.mxu0
      %v630 = vadd.f32 %v472, %v629
      %v631 = vpop.f32.mrf.mxu0
      %632 = vmatprep.mubr.f32.mxu0 0.0
      %633 = vmatmul.mubr.f32.gmra.mxu0 %v503
      %v634 = vpop.f32.mrf.mxu0
      %v635 = vadd.f32 %v472, %v634
      %v636 = vpop.f32.mrf.mxu0
      %637 = vmatprep.mubr.f32.mxu0 0.0
      %638 = vmatmul.mubr.f32.gmra.mxu0 %v506
      %v639 = vpop.f32.mrf.mxu0
      %v640 = vadd.f32 %v472, %v639
      %v641 = vpop.f32.mrf.mxu0
      %642 = vmatprep.mubr.f32.mxu0 0.0
      %643 = vmatmul.mubr.f32.gmra.mxu0 %v509
      %v644 = vpop.f32.mrf.mxu0
      %v645 = vadd.f32 %v472, %v644
      %v646 = vpop.f32.mrf.mxu0
      %647 = vmatprep.mubr.f32.mxu0 0.0
      %648 = vmatmul.mubr.f32.gmra.mxu0 %v512
      %v649 = vpop.f32.mrf.mxu0
      %v650 = vadd.f32 %v472, %v649
      %v651 = vpop.f32.mrf.mxu0
      %652 = vmatprep.mubr.f32.mxu0 0.0
      %653 = vmatmul.mubr.f32.gmra.mxu0 %v515
      %v654 = vpop.f32.mrf.mxu0
      %v655 = vadd.f32 %v472, %v654
      %v656 = vpop.f32.mrf.mxu0
      %657 = vmatprep.mubr.f32.mxu0 0.0
      %658 = vmatmul.mubr.f32.gmra.mxu0 %v518
      %v659 = vpop.f32.mrf.mxu0
      %v660 = vadd.f32 %v472, %v659
      %v661 = vpop.f32.mrf.mxu0
      %662 = vmatprep.mubr.f32.mxu0 0.0
      %663 = vmatmul.mubr.f32.gmra.mxu0 %v521
      %v664 = vpop.f32.mrf.mxu0
      %v665 = vadd.f32 %v472, %v664
      %v666 = vpop.f32.mrf.mxu0
      %667 = vdwg.mxu0
      %vm668 = vcmask 31744
      %669 = vst.msk [vmem:[%s226] sm:$0xff] %vm668, %v590
      %670 = vst.msk [vmem:[%s226 + $0x8] sm:$0xff] %vm668, %v595
      %671 = vst.msk [vmem:[%s226 + $0x10] sm:$0xff] %vm668, %v600
      %672 = vst.msk [vmem:[%s226 + $0x18] sm:$0xff] %vm668, %v605
      %673 = vst.msk [vmem:[%s226 + $0x20] sm:$0xff] %vm668, %v610
      %674 = vst.msk [vmem:[%s226 + $0x28] sm:$0xff] %vm668, %v615
      %675 = vst.msk [vmem:[%s226 + $0x30] sm:$0xff] %vm668, %v620
      %676 = vst.msk [vmem:[%s226 + $0x38] sm:$0xff] %vm668, %v625
      %677 = vst.msk [vmem:[%s226 + $0x40] sm:$0xff] %vm668, %v630
      %678 = vst.msk [vmem:[%s226 + $0x48] sm:$0xff] %vm668, %v635
      %679 = vst.msk [vmem:[%s226 + $0x50] sm:$0xff] %vm668, %v640
      %680 = vst.msk [vmem:[%s226 + $0x58] sm:$0xff] %vm668, %v645
      %681 = vst.msk [vmem:[%s226 + $0x60] sm:$0xff] %vm668, %v650
      %682 = vst.msk [vmem:[%s226 + $0x68] sm:$0xff] %vm668, %v655
      %683 = vst.msk [vmem:[%s226 + $0x70] sm:$0xff] %vm668, %v660
      %684 = vst.msk [vmem:[%s226 + $0x78] sm:$0xff] %vm668, %v665
      %s685 = smul.u32 16, %s16
      %p686 = scmp.lt.s32.totalorder %s685, 31
      %s687 = scalar_select %p686, %s685, 31
      %s688 = smul.addr %s687, 8
      %s689 = scalar_lea.vmem %s5, %s688
      // Predicated region
      $region41: #{rl_net_test_forward.1} parent=39 // pred_check
        %p690 = pneg %p144
      $region42: #{rl_net_test_forward.1} parent=39 // pred_check_branch
        %692 = sbr.rel (%p690) target = $region44
      $region43: #{rl_net_test_forward.1} parent=39 // pred_region
        %s693 = smul.u32 16, %s16
      $region44: #{rl_net_test_forward.1} parent=39 // pred_fallthru
        _
    $region40: #{rl_net_test_forward.1} parent=5 // pred_fallthru
      _
    %p694 = scmp.le.s32.totalorder 2, %s11
    // Predicated region
    $region45: #{rl_net_test_forward.1} parent=5 // pred_check
      %p695 = pneg %p694
    $region46: #{rl_net_test_forward.1} parent=5 // pred_check_branch
      %697 = sbr.rel (%p695) target = $region48
    $region47: #{rl_net_test_forward.1} parent=5 // pred_region
      %s698 = ssub.s32 %s11, 2
      // Predicated region
      $region49: #{rl_net_test_forward.1} parent=47 // pred_check
        %p699 = pneg %p150
      $region50: #{rl_net_test_forward.1} parent=47 // pred_check_branch
        %701 = sbr.rel (%p699) target = $region52
      $region51: #{rl_net_test_forward.1} parent=47 // pred_region
        %s702 = smul.u32 16, %s17
        %p703 = scmp.lt.s32.totalorder %s702, 31
        %s704 = scalar_select %p703, %s702, 31
        %s705 = smul.addr %s704, 8
        %s706 = scalar_lea.vmem %s5, %s705
      $region52: #{rl_net_test_forward.1} parent=47 // pred_fallthru
        _
    $region48: #{rl_net_test_forward.1} parent=5 // pred_fallthru
      _
  $region6: #{rl_net_test_forward.1} parent=0 // loop_footer
    %s15 = sadd.s32 1, %s11
  $region7: #{rl_net_test_forward.1} parent=0 // loop_footer_branch
    %10 = sbr.rel target = $region3
  $region8: #{rl_net_test_forward.1} parent=0 // loop_exit
    _

</llo_original>
